<compile_context>
chip_gen: v7x
topology: tpu7x:2x2x1
jax: 0.10.0
libtpu: 0.0.40
codegen_flags: <defaults>
</compile_context>

<pallas_src>
import functools

import jax
import jax.numpy as jnp
import numpy as np
from jax.experimental import pallas as pl
from jax.experimental.pallas import tpu as pltpu

MARGIN = 0.0
THRESHOLD = 0.4
MAX_VIOLATION = False

_LANE = 128
_SUBLANE = 8


def _round_up(x, m):
    return (x + m - 1) // m * m


def _loss_kernel(im_ref, s_ref, rowidx_ref, colidx_ref, out_ref, *,
                 n_valid, margin, max_violation, bf16_matmul):
    im = im_ref[...]
    s = s_ref[...]
    if im.dtype != jnp.float32:
        im = im.astype(jnp.float32)
    if s.dtype != jnp.float32:
        s = s.astype(jnp.float32)

    # L2 row-normalization: one EUP rsqrt per row + a free VALU multiply.
    # max(., tiny) keeps zero-padded rows finite (they normalize to exactly 0).
    im_scale = jax.lax.rsqrt(
        jnp.maximum(jnp.sum(im * im, axis=-1, keepdims=True), 1e-30))
    s_scale = jax.lax.rsqrt(
        jnp.maximum(jnp.sum(s * s, axis=-1, keepdims=True), 1e-30))
    im_n = im * im_scale
    s_n = s * s_scale

    if bf16_matmul:
        # optional v6e path: bf16 MXU operands, f32 accumulation.
        im_n = im_n.astype(jnp.bfloat16)
        s_n = s_n.astype(jnp.bfloat16)

    # Cosine scores on the MXU; contract the shared feature axis directly so
    # no transposed operand is materialized.
    scores = jax.lax.dot_general(
        im_n, s_n, dimension_numbers=(((1,), (1,)), ((), ())),
        preferred_element_type=jnp.float32)                       # (Nr, Nc)

    nr, nc = scores.shape
    row_iota = jax.lax.broadcasted_iota(jnp.int32, (nr, nc), 0)
    col_iota = jax.lax.broadcasted_iota(jnp.int32, (nr, nc), 1)

    # selection masks rebuilt from (N,)-sized index vectors.
    row_sel = col_iota == rowidx_ref[...]       # d1[i] = scores[i, row_idx[i]]
    col_sel = row_iota == colidx_ref[...]       # d2[j] = scores[col_idx[j], j]

    d1 = jnp.sum(jnp.where(row_sel, scores, 0.0), axis=1, keepdims=True)  # (Nr, 1)
    d2 = jnp.sum(jnp.where(col_sel, scores, 0.0), axis=0, keepdims=True)  # (1, Nc)

    cost_s = jnp.maximum(margin + scores - d1, 0.0)
    cost_im = jnp.maximum(margin + scores - d2, 0.0)

    # one fused mask: drop diagonal AND padded rows/cols in a single select.
    keep = ((row_iota != col_iota)
            & (row_iota < n_valid)
            & (col_iota < n_valid))

    if max_violation:
        cost_s = jnp.where(keep, cost_s, 0.0)
        cost_im = jnp.where(keep, cost_im, 0.0)
        loss = (jnp.sum(jnp.max(cost_s, axis=1, keepdims=True))
                + jnp.sum(jnp.max(cost_im, axis=0, keepdims=True)))
    else:
        loss = jnp.sum(jnp.where(keep, cost_s + cost_im, 0.0))
    out_ref[0, 0] = loss


def make_selection_indices(relevances, key):
    """Mirror the torch code's per-row / per-column random choice among entries
    with relevance > threshold.  Exact torch.randint RNG stream cannot be
    reproduced, so we use a jax.random key (deterministic in-script)."""
    matching = relevances > THRESHOLD
    k1, k2 = jax.random.split(key)
    u1 = jax.random.uniform(k1, matching.shape)
    u2 = jax.random.uniform(k2, matching.shape)
    row_idx = jnp.argmax(jnp.where(matching, u1, -1.0), axis=1).astype(jnp.int32)
    col_idx = jnp.argmax(jnp.where(matching, u2, -1.0), axis=0).astype(jnp.int32)
    # TODO(synk): torch builds d2 with a boolean masked-select whose row-major
    # ordering can permute columns when selections collide; we implement the
    # intended per-column gather instead.
    return row_idx, col_idx


def semantic_contrastive_loss_pallas(im, s, row_idx, col_idx, *, bf16_matmul=False):
    n, d = im.shape
    assert s.shape == (n, d)

    # Lane-dense shaping: pad features to a multiple of 128, pad the sentence
    # axis (score columns) to a multiple of 128, pad image rows to a multiple
    # of 8.  Padded rows/cols contribute zero cost (masked in-kernel).
    nr = _round_up(n, _SUBLANE)
    nc = _round_up(n, _LANE)
    dp = _round_up(d, _LANE)

    im_p = jnp.zeros((nr, dp), jnp.float32).at[:n, :d].set(im.astype(jnp.float32))
    s_p = jnp.zeros((nc, dp), jnp.float32).at[:n, :d].set(s.astype(jnp.float32))
    row_idx_p = jnp.zeros((nr, 1), jnp.int32).at[:n, 0].set(row_idx.astype(jnp.int32))
    col_idx_p = jnp.zeros((1, nc), jnp.int32).at[0, :n].set(col_idx.astype(jnp.int32))

    cost = pl.CostEstimate(
        flops=2 * nr * nc * dp + 10 * nr * nc,
        transcendentals=nr + nc,
        bytes_accessed=4 * (nr * dp + nc * dp + nr + nc + 1),
    )

    kernel = functools.partial(
        _loss_kernel, n_valid=n, margin=MARGIN,
        max_violation=MAX_VIOLATION, bf16_matmul=bf16_matmul)

    out = pl.pallas_call(
        kernel,
        out_shape=jax.ShapeDtypeStruct((1, 1), jnp.float32),
        in_specs=[pl.BlockSpec(memory_space=pltpu.MemorySpace.VMEM)] * 4,
        out_specs=pl.BlockSpec(memory_space=pltpu.MemorySpace.SMEM),
        cost_estimate=cost,
    )(im_p, s_p, row_idx_p, col_idx_p)
    # TODO(synk): for large N, replace the single block with a row-stripe grid
    # ((TILE_M, N) score tiles, row axis marked 'parallel' for v7x's 2 TCs,
    # scalar loss accumulated in scratch and finalized with pl.when(last)).
    return out[0, 0]


def semantic_contrastive_loss_ref(im, s, row_idx, col_idx):
    n = im.shape[0]
    im_n = im / jnp.linalg.norm(im, axis=1, keepdims=True)
    s_n = s / jnp.linalg.norm(s, axis=1, keepdims=True)
    scores = im_n @ s_n.T
    d1 = scores[jnp.arange(n), row_idx][:, None]
    d2 = scores[col_idx, jnp.arange(n)][None, :]
    cost_s = jnp.maximum(MARGIN + scores - d1, 0.0)
    cost_im = jnp.maximum(MARGIN + scores - d2, 0.0)
    eye = jnp.eye(n, dtype=bool)
    cost_s = jnp.where(eye, 0.0, cost_s)
    cost_im = jnp.where(eye, 0.0, cost_im)
    if MAX_VIOLATION:
        return jnp.sum(jnp.max(cost_s, axis=1)) + jnp.sum(jnp.max(cost_im, axis=0))
    return jnp.sum(cost_s) + jnp.sum(cost_im)


if __name__ == "__main__":
    N, D = 8, 32
    key = jax.random.PRNGKey(0)
    k_im, k_s, k_rel, k_sel = jax.random.split(key, 4)

    im = jax.random.normal(k_im, (N, D), dtype=jnp.float32)
    s = jax.random.normal(k_s, (N, D), dtype=jnp.float32)
    relevances = jax.random.uniform(k_rel, (N, N), dtype=jnp.float32)
    # guarantee at least one match per row and per column (as the torch code assumes)
    relevances = relevances.at[jnp.arange(N), jnp.arange(N)].set(0.9)

    row_idx, col_idx = make_selection_indices(relevances, k_sel)

    loss = semantic_contrastive_loss_pallas(im, s, row_idx, col_idx)
    jax.block_until_ready(loss)

    loss_ref = semantic_contrastive_loss_ref(im, s, row_idx, col_idx)
    # slightly looser tolerance: in-kernel EUP rsqrt vs. sqrt+divide in the ref.
    np.testing.assert_allclose(np.asarray(loss), np.asarray(loss_ref),
                               rtol=1e-3, atol=1e-3)
    print("KERNEL_OK")
</pallas_src>

<mosaic_0001>
module attributes {stable_mosaic.version = 11 : i64} {
  func.func @_loss_kernel(%arg0: memref<8x128xf32, #tpu.memory_space<vmem>>, %arg1: memref<128x128xf32, #tpu.memory_space<vmem>>, %arg2: memref<8x1xi32, #tpu.memory_space<vmem>>, %arg3: memref<1x128xi32, #tpu.memory_space<vmem>>, %arg4: memref<1x1xf32, #tpu.memory_space<smem>>) attributes {dimension_semantics = [], scalar_prefetch = 0 : i64, scratch_operands = 0 : i64, tpu.core_type = #tpu.core_type<tc>} {
    %c0 = arith.constant 0 : index
    %c0_0 = arith.constant 0 : index
    %0 = vector.load %arg0[%c0, %c0_0] : memref<8x128xf32, #tpu.memory_space<vmem>>, vector<8x128xf32>
    %c0_1 = arith.constant 0 : index
    %c0_2 = arith.constant 0 : index
    %1 = vector.load %arg1[%c0_1, %c0_2] : memref<128x128xf32, #tpu.memory_space<vmem>>, vector<128x128xf32>
    %2 = arith.mulf %0, %0 : vector<8x128xf32>
    %cst = arith.constant dense<0.000000e+00> : vector<8xf32>
    %3 = vector.multi_reduction <add>, %2, %cst [1] : vector<8x128xf32> to vector<8xf32>
    %4 = vector.shape_cast %3 : vector<8xf32> to vector<8x1xf32>
    %cst_3 = arith.constant 1.000000e-30 : f32
    %5 = vector.broadcast %cst_3 : f32 to vector<8x1xf32>
    %6 = arith.maximumf %4, %5 : vector<8x1xf32>
    %7 = math.rsqrt %6 : vector<8x1xf32>
    %8 = arith.mulf %1, %1 : vector<128x128xf32>
    %cst_4 = arith.constant dense<0.000000e+00> : vector<128xf32>
    %9 = vector.multi_reduction <add>, %8, %cst_4 [1] : vector<128x128xf32> to vector<128xf32>
    %10 = vector.shape_cast %9 : vector<128xf32> to vector<128x1xf32>
    %cst_5 = arith.constant 1.000000e-30 : f32
    %11 = vector.broadcast %cst_5 : f32 to vector<128x1xf32>
    %12 = arith.maximumf %10, %11 : vector<128x1xf32>
    %13 = math.rsqrt %12 : vector<128x1xf32>
    %14 = vector.broadcast %7 : vector<8x1xf32> to vector<8x128xf32>
    %15 = arith.mulf %0, %14 : vector<8x128xf32>
    %16 = vector.broadcast %13 : vector<128x1xf32> to vector<128x128xf32>
    %17 = arith.mulf %1, %16 : vector<128x128xf32>
    %cst_6 = arith.constant dense<0.000000e+00> : vector<8x128xf32>
    %18 = tpu.matmul %15, %17, %cst_6 {dimension_numbers = #tpu.dot_dimension_numbers<[1], [1], [0], [0], [0, 0, 1, 0], [], []>} : vector<8x128xf32>, vector<128x128xf32>, vector<8x128xf32> -> vector<8x128xf32>
    %19 = tpu.iota {dimensions = array<i32: 0>} : vector<8x128xi32>
    %20 = tpu.iota {dimensions = array<i32: 1>} : vector<8x128xi32>
    %c0_7 = arith.constant 0 : index
    %c0_8 = arith.constant 0 : index
    %21 = vector.load %arg2[%c0_7, %c0_8] : memref<8x1xi32, #tpu.memory_space<vmem>>, vector<8x1xi32>
    %22 = vector.broadcast %21 : vector<8x1xi32> to vector<8x128xi32>
    %23 = arith.cmpi eq, %20, %22 : vector<8x128xi32>
    %c0_9 = arith.constant 0 : index
    %c0_10 = arith.constant 0 : index
    %24 = vector.load %arg3[%c0_9, %c0_10] : memref<1x128xi32, #tpu.memory_space<vmem>>, vector<1x128xi32>
    %25 = vector.broadcast %24 : vector<1x128xi32> to vector<8x128xi32>
    %26 = arith.cmpi eq, %19, %25 : vector<8x128xi32>
    %cst_11 = arith.constant 0.000000e+00 : f32
    %27 = vector.broadcast %cst_11 : f32 to vector<8x128xf32>
    %28 = arith.select %23, %18, %27 : vector<8x128xi1>, vector<8x128xf32>
    %cst_12 = arith.constant dense<0.000000e+00> : vector<8xf32>
    %29 = vector.multi_reduction <add>, %28, %cst_12 [1] : vector<8x128xf32> to vector<8xf32>
    %30 = vector.shape_cast %29 : vector<8xf32> to vector<8x1xf32>
    %cst_13 = arith.constant 0.000000e+00 : f32
    %31 = vector.broadcast %cst_13 : f32 to vector<8x128xf32>
    %32 = arith.select %26, %18, %31 : vector<8x128xi1>, vector<8x128xf32>
    %cst_14 = arith.constant dense<0.000000e+00> : vector<128xf32>
    %33 = vector.multi_reduction <add>, %32, %cst_14 [0] : vector<8x128xf32> to vector<128xf32>
    %34 = vector.shape_cast %33 : vector<128xf32> to vector<1x128xf32>
    %cst_15 = arith.constant 0.000000e+00 : f32
    %35 = vector.broadcast %cst_15 : f32 to vector<8x128xf32>
    %36 = arith.addf %35, %18 : vector<8x128xf32>
    %37 = vector.broadcast %30 : vector<8x1xf32> to vector<8x128xf32>
    %38 = arith.subf %36, %37 : vector<8x128xf32>
    %cst_16 = arith.constant 0.000000e+00 : f32
    %39 = vector.broadcast %cst_16 : f32 to vector<8x128xf32>
    %40 = arith.maximumf %38, %39 : vector<8x128xf32>
    %cst_17 = arith.constant 0.000000e+00 : f32
    %41 = vector.broadcast %cst_17 : f32 to vector<8x128xf32>
    %42 = arith.addf %41, %18 : vector<8x128xf32>
    %43 = vector.broadcast %34 : vector<1x128xf32> to vector<8x128xf32>
    %44 = arith.subf %42, %43 : vector<8x128xf32>
    %cst_18 = arith.constant 0.000000e+00 : f32
    %45 = vector.broadcast %cst_18 : f32 to vector<8x128xf32>
    %46 = arith.maximumf %44, %45 : vector<8x128xf32>
    %47 = arith.cmpi ne, %19, %20 : vector<8x128xi32>
    %c8_i32 = arith.constant 8 : i32
    %48 = vector.broadcast %c8_i32 : i32 to vector<8x128xi32>
    %49 = arith.cmpi slt, %19, %48 : vector<8x128xi32>
    %50 = arith.andi %47, %49 : vector<8x128xi1>
    %c8_i32_19 = arith.constant 8 : i32
    %51 = vector.broadcast %c8_i32_19 : i32 to vector<8x128xi32>
    %52 = arith.cmpi slt, %20, %51 : vector<8x128xi32>
    %53 = arith.andi %50, %52 : vector<8x128xi1>
    %54 = arith.addf %40, %46 : vector<8x128xf32>
    %cst_20 = arith.constant 0.000000e+00 : f32
    %55 = vector.broadcast %cst_20 : f32 to vector<8x128xf32>
    %56 = arith.select %53, %54, %55 : vector<8x128xi1>, vector<8x128xf32>
    %57 = vector.shape_cast %56 : vector<8x128xf32> to vector<1x8x128xf32>
    %cst_21 = arith.constant dense<0.000000e+00> : vector<1xf32>
    %58 = vector.multi_reduction <add>, %57, %cst_21 [1, 2] : vector<1x8x128xf32> to vector<1xf32>
    %59 = vector.shape_cast %58 : vector<1xf32> to vector<1x1x1xf32>
    %60 = vector.extract %59[0, 0, 0] : f32 from vector<1x1x1xf32>
    %c0_22 = arith.constant 0 : index
    %c0_23 = arith.constant 0 : index
    %61 = memref.load %arg4[%c0_22, %c0_23] : memref<1x1xf32, #tpu.memory_space<smem>>
    memref.store %60, %arg4[%c0_22, %c0_23] : memref<1x1xf32, #tpu.memory_space<smem>>
    return
  }
}

</mosaic_0001>

<llo_original>
// kernel: tpu_custom_call.1
$region0: #{tpu_custom_call.1}
  #allocation0 [shape = 'u32[]', space=smem, size = 0x4, offset = 0x4, fixed_abs, tag = 'smem constant byte address 0x4 - core index']
  #allocation1 [shape = 'u32[144,128]{1,0:T(1,128)}', space=vmem, size = 0x12000, scoped, tag = 'internal scratch']
  %s0 = inlined_call_operand.vmem [shape: f32[8,128], index: 0, kind: input, shape index: {}]
  %s1 = inlined_call_operand.hbm [shape: f32[128,128], index: 1, kind: input, shape index: {}]
  %s2 = inlined_call_operand.vmem [shape: s32[8,1], index: 2, kind: input, shape index: {}]
  %s3 = inlined_call_operand.vmem [shape: s32[1,128], index: 3, kind: input, shape index: {}]
  %s4 = inlined_call_operand.hbm [shape: f32[1,1], index: 4, kind: output, shape index: {}]
  %s5 = sld [smem:[#allocation0]]
  $region30: #{tpu_custom_call.1} parent=0
    _
  %s7 = ssub.s32 1, %s5
  %s8 = scalar_select 0, %s7, %s5
  $region1: #{tpu_custom_call.1} parent=0
    #allocation2 [shape = 'u8[65536]{0}', space=vmem, size = 0x10000, scoped, tag = 'input window, operand 1, single buffered']
    #allocation3 [shape = 's32[1]{0}', space=sflag, size = 0x4, scoped, tag = 'scoped memory for tpu_custom_call.1']
    #allocation4 [shape = 's32[1]{0}', space=sflag, size = 0x4, scoped, tag = 'scoped memory for tpu_custom_call.1']
    #allocation5 [shape = 'u8[512]{0}', space=smem, size = 0x200, scoped, tag = 'output window, operand 0, single buffered']
    %9 = vsyncpa [#allocation3], 0
    %10 = vsyncpa [#allocation4], 0
    // Predicated region
    $region2: #{tpu_custom_call.1} parent=1 // pred_check
      _
    $region3: #{tpu_custom_call.1} parent=1 // pred_check_branch
      %12 = sbr.rel (0) target = $region5
    $region4: #{tpu_custom_call.1} parent=1 // pred_region
      _
    $region5: #{tpu_custom_call.1} parent=1 // pred_fallthru
      _
    // Predicated region
    $region6: #{tpu_custom_call.1} parent=1 // pred_check
      _
    $region7: #{tpu_custom_call.1} parent=1 // pred_check_branch
      %14 = sbr.rel (0) target = $region9
    $region8: #{tpu_custom_call.1} parent=1 // pred_region
      %s16 = ssub.s32 2048, 2048
      %17 = vsyncadd [#allocation3], %s16
      %s18 = sshll.u32 [#allocation2], 4
      %s19 = int_to_ptr.vmem [resolvable:$true] %s18
      %24 = dma.hbm_to_vmem [thread:$0]  %s1, 2048, %s19, [#allocation3], 128, 128, 8
    $region9: #{tpu_custom_call.1} parent=1 // pred_fallthru
      _
    // Predicated region
    $region10: #{tpu_custom_call.1} parent=1 // pred_check
      _
    $region11: #{tpu_custom_call.1} parent=1 // pred_check_branch
      %26 = sbr.rel (0) target = $region13
    $region12: #{tpu_custom_call.1} parent=1 // pred_region
      _
    $region13: #{tpu_custom_call.1} parent=1 // pred_fallthru
      _
    // Predicated region
    $region14: #{tpu_custom_call.1} parent=1 // pred_check
      _
    $region15: #{tpu_custom_call.1} parent=1 // pred_check_branch
      %28 = sbr.rel (0) target = $region17
    $region16: #{tpu_custom_call.1} parent=1 // pred_region
      _
    $region17: #{tpu_custom_call.1} parent=1 // pred_fallthru
      _
    // Predicated region
    $region18: #{tpu_custom_call.1} parent=1 // pred_check
      _
    $region19: #{tpu_custom_call.1} parent=1 // pred_check_branch
      %30 = sbr.rel (0) target = $region21
    $region20: #{tpu_custom_call.1} parent=1 // pred_region
      %31 = dma.done [#allocation3], 2048
    $region21: #{tpu_custom_call.1} parent=1 // pred_fallthru
      _
    %v32 = vld [vmem:[%s0] sm:$0xff]
    %v33 = vld [vmem:[#allocation2] sm:$0xff]
    %v34 = vld [vmem:[#allocation2 + $0x8] sm:$0xff]
    %v35 = vld [vmem:[#allocation2 + $0x10] sm:$0xff]
    %v36 = vld [vmem:[#allocation2 + $0x18] sm:$0xff]
    %v37 = vld [vmem:[#allocation2 + $0x20] sm:$0xff]
    %v38 = vld [vmem:[#allocation2 + $0x28] sm:$0xff]
    %v39 = vld [vmem:[#allocation2 + $0x30] sm:$0xff]
    %v40 = vld [vmem:[#allocation2 + $0x38] sm:$0xff]
    %v41 = vld [vmem:[#allocation2 + $0x40] sm:$0xff]
    %v42 = vld [vmem:[#allocation2 + $0x48] sm:$0xff]
    %v43 = vld [vmem:[#allocation2 + $0x50] sm:$0xff]
    %v44 = vld [vmem:[#allocation2 + $0x58] sm:$0xff]
    %v45 = vld [vmem:[#allocation2 + $0x60] sm:$0xff]
    %v46 = vld [vmem:[#allocation2 + $0x68] sm:$0xff]
    %v47 = vld [vmem:[#allocation2 + $0x70] sm:$0xff]
    %v48 = vld [vmem:[#allocation2 + $0x78] sm:$0xff]
    %v49 = vmul.f32 %v32, %v32
    %50 = vadd.xlane.f32.xlu0 %v49
    %v51 = vpop.xlane.xlu0 %50
    %v52 = vmax.f32 %v51, 1e-30
    %v53 = vrsqrt.pop %v52
    %v54 = vmul.f32 %v33, %v33
    %v55 = vmul.f32 %v34, %v34
    %v56 = vmul.f32 %v35, %v35
    %v57 = vmul.f32 %v36, %v36
    %v58 = vmul.f32 %v37, %v37
    %v59 = vmul.f32 %v38, %v38
    %v60 = vmul.f32 %v39, %v39
    %v61 = vmul.f32 %v40, %v40
    %v62 = vmul.f32 %v41, %v41
    %v63 = vmul.f32 %v42, %v42
    %v64 = vmul.f32 %v43, %v43
    %v65 = vmul.f32 %v44, %v44
    %v66 = vmul.f32 %v45, %v45
    %v67 = vmul.f32 %v46, %v46
    %v68 = vmul.f32 %v47, %v47
    %v69 = vmul.f32 %v48, %v48
    %70 = vadd.xlane.f32.xlu0 %v54
    %v71 = vpop.xlane.xlu0 %70
    %72 = vadd.xlane.f32.xlu0 %v55
    %v73 = vpop.xlane.xlu0 %72
    %74 = vadd.xlane.f32.xlu0 %v56
    %v75 = vpop.xlane.xlu0 %74
    %76 = vadd.xlane.f32.xlu0 %v57
    %v77 = vpop.xlane.xlu0 %76
    %78 = vadd.xlane.f32.xlu0 %v58
    %v79 = vpop.xlane.xlu0 %78
    %80 = vadd.xlane.f32.xlu0 %v59
    %v81 = vpop.xlane.xlu0 %80
    %82 = vadd.xlane.f32.xlu0 %v60
    %v83 = vpop.xlane.xlu0 %82
    %84 = vadd.xlane.f32.xlu0 %v61
    %v85 = vpop.xlane.xlu0 %84
    %86 = vadd.xlane.f32.xlu0 %v62
    %v87 = vpop.xlane.xlu0 %86
    %88 = vadd.xlane.f32.xlu0 %v63
    %v89 = vpop.xlane.xlu0 %88
    %90 = vadd.xlane.f32.xlu0 %v64
    %v91 = vpop.xlane.xlu0 %90
    %92 = vadd.xlane.f32.xlu0 %v65
    %v93 = vpop.xlane.xlu0 %92
    %94 = vadd.xlane.f32.xlu0 %v66
    %v95 = vpop.xlane.xlu0 %94
    %96 = vadd.xlane.f32.xlu0 %v67
    %v97 = vpop.xlane.xlu0 %96
    %98 = vadd.xlane.f32.xlu0 %v68
    %v99 = vpop.xlane.xlu0 %98
    %100 = vadd.xlane.f32.xlu0 %v69
    %v101 = vpop.xlane.xlu0 %100
    %v102 = vmax.f32 %v71, 1e-30
    %v103 = vmax.f32 %v73, 1e-30
    %v104 = vmax.f32 %v75, 1e-30
    %v105 = vmax.f32 %v77, 1e-30
    %v106 = vmax.f32 %v79, 1e-30
    %v107 = vmax.f32 %v81, 1e-30
    %v108 = vmax.f32 %v83, 1e-30
    %v109 = vmax.f32 %v85, 1e-30
    %v110 = vmax.f32 %v87, 1e-30
    %v111 = vmax.f32 %v89, 1e-30
    %v112 = vmax.f32 %v91, 1e-30
    %v113 = vmax.f32 %v93, 1e-30
    %v114 = vmax.f32 %v95, 1e-30
    %v115 = vmax.f32 %v97, 1e-30
    %v116 = vmax.f32 %v99, 1e-30
    %v117 = vmax.f32 %v101, 1e-30
    %v118 = vrsqrt.pop %v102
    %v119 = vrsqrt.pop %v103
    %v120 = vrsqrt.pop %v104
    %v121 = vrsqrt.pop %v105
    %v122 = vrsqrt.pop %v106
    %v123 = vrsqrt.pop %v107
    %v124 = vrsqrt.pop %v108
    %v125 = vrsqrt.pop %v109
    %v126 = vrsqrt.pop %v110
    %v127 = vrsqrt.pop %v111
    %v128 = vrsqrt.pop %v112
    %v129 = vrsqrt.pop %v113
    %v130 = vrsqrt.pop %v114
    %v131 = vrsqrt.pop %v115
    %v132 = vrsqrt.pop %v116
    %v133 = vrsqrt.pop %v117
    %v134 = vmul.f32 %v32, %v53
    %v135 = vmul.f32 %v33, %v118
    %v136 = vmul.f32 %v34, %v119
    %v137 = vmul.f32 %v35, %v120
    %v138 = vmul.f32 %v36, %v121
    %v139 = vmul.f32 %v37, %v122
    %v140 = vmul.f32 %v38, %v123
    %v141 = vmul.f32 %v39, %v124
    %v142 = vmul.f32 %v40, %v125
    %v143 = vmul.f32 %v41, %v126
    %v144 = vmul.f32 %v42, %v127
    %v145 = vmul.f32 %v43, %v128
    %v146 = vmul.f32 %v44, %v129
    %v147 = vmul.f32 %v45, %v130
    %v148 = vmul.f32 %v46, %v131
    %v149 = vmul.f32 %v47, %v132
    %v150 = vmul.f32 %v48, %v133
    %151 = vmatprep.subr.mxu0 0.0
    %152 = vmatpush1.xpose.msra.mxu0 %v135
    %153 = vmatprep.subr.mxu0 0.0
    %154 = vmatpush1.xpose.msra.mxu0 %v136
    %155 = vmatprep.subr.mxu0 0.0
    %156 = vmatpush1.xpose.msra.mxu0 %v137
    %157 = vmatprep.subr.mxu0 0.0
    %158 = vmatpush1.xpose.msra.mxu0 %v138
    %159 = vmatprep.subr.mxu0 0.0
    %160 = vmatpush1.xpose.msra.mxu0 %v139
    %161 = vmatprep.subr.mxu0 0.0
    %162 = vmatpush1.xpose.msra.mxu0 %v140
    %163 = vmatprep.subr.mxu0 0.0
    %164 = vmatpush1.xpose.msra.mxu0 %v141
    %165 = vmatprep.subr.mxu0 0.0
    %166 = vmatpush1.xpose.msra.mxu0 %v142
    %167 = vmatprep.subr.mxu0 0.0
    %168 = vmatpush1.xpose.msra.mxu0 %v143
    %169 = vmatprep.subr.mxu0 0.0
    %170 = vmatpush1.xpose.msra.mxu0 %v144
    %171 = vmatprep.subr.mxu0 0.0
    %172 = vmatpush1.xpose.msra.mxu0 %v145
    %173 = vmatprep.subr.mxu0 0.0
    %174 = vmatpush1.xpose.msra.mxu0 %v146
    %175 = vmatprep.subr.mxu0 0.0
    %176 = vmatpush1.xpose.msra.mxu0 %v147
    %177 = vmatprep.subr.mxu0 0.0
    %178 = vmatpush1.xpose.msra.mxu0 %v148
    %179 = vmatprep.subr.mxu0 0.0
    %180 = vmatpush1.xpose.msra.mxu0 %v149
    %181 = vmatprep.subr.mxu0 0.0
    %182 = vmatpush1.xpose.msra.mxu0 %v150
    %183 = vmatprep.subr.mxu0 0.0
    %184 = vmatpush1.xpose.msra.mxu0 0.0
    %185 = vmatprep.subr.mxu0 0.0
    %186 = vmatpush1.xpose.msra.mxu0 0.0
    %187 = vmatprep.subr.mxu0 0.0
    %188 = vmatpush1.xpose.msra.mxu0 0.0
    %189 = vmatprep.subr.mxu0 0.0
    %190 = vmatpush1.xpose.msra.mxu0 0.0
    %191 = vmatprep.subr.mxu0 0.0
    %192 = vmatpush1.xpose.msra.mxu0 0.0
    %193 = vmatprep.subr.mxu0 0.0
    %194 = vmatpush1.xpose.msra.mxu0 0.0
    %195 = vmatprep.subr.mxu0 0.0
    %196 = vmatpush1.xpose.msra.mxu0 0.0
    %197 = vmatprep.subr.mxu0 0.0
    %198 = vmatpush1.xpose.msra.mxu0 0.0
    %199 = vmatprep.subr.mxu0 0.0
    %200 = vmatpush1.xpose.msra.mxu0 0.0
    %201 = vmatprep.subr.mxu0 0.0
    %202 = vmatpush1.xpose.msra.mxu0 0.0
    %203 = vmatprep.subr.mxu0 0.0
    %204 = vmatpush1.xpose.msra.mxu0 0.0
    %205 = vmatprep.subr.mxu0 0.0
    %206 = vmatpush1.xpose.msra.mxu0 0.0
    %207 = vmatprep.subr.mxu0 0.0
    %208 = vmatpush1.xpose.msra.mxu0 0.0
    %209 = vmatprep.subr.mxu0 0.0
    %210 = vmatpush1.xpose.msra.mxu0 0.0
    %211 = vmatprep.subr.mxu0 0.0
    %212 = vmatpush1.xpose.msra.mxu0 0.0
    %213 = vmatprep.subr.mxu0 0.0
    %214 = vmatpush1.xpose.msra.mxu0 0.0
    %215 = vmatprep.mubr.f32.mxu0 0.0
    %216 = vmatmul.mubr.f32.gmra.mrb[0].mxu0 %v134
    %v217 = vpop.f32.mrb[0].mxu0
    %v218 = vadd.f32 0.0, %v217
    %v219 = vpop.f32.mrb[0].mxu0
    %220 = vdwg.mxu0
    %v221 = vlaneseq
    %v222 = vshrl.u32 %v221, 7
    %v223 = vlaneseq
    %v224 = vand.u32 %v223, 127
    %v225 = vld [vmem:[%s2] sm:$0xff]
    %226 = vset.pattern.permute.xlu0 0
    %227 = vperm.xlu0 %226, %v225
    %v228 = vpop.permute.xlu0 %227
    %vm229 = vcmp.eq.s32.totalorder %v224, %v228
    %v230 = vld [vmem:[%s3] sm:$0x1]
    %v231 = vlaneseq
    %v232 = vshrl.u32 %v231, 7
    %v233 = vsub.s32 0, %v232
    %v234 = vrot.slane %v230, %v233
    %vm235 = vcmp.eq.s32.totalorder %v222, %v234
    %v236 = vsel %vm229, %v218, 0.0
    %237 = vadd.xlane.f32.xlu0 %v236
    %v238 = vpop.xlane.xlu0 %237
    %v239 = vsel %vm235, %v218, 0.0
    %v240 = vrot.slane %v239, 4
    %v241 = vadd.f32 %v239, %v240
    %v242 = vrot.slane %v241, 2
    %v243 = vadd.f32 %v241, %v242
    %v244 = vrot.slane %v243, 1
    %v245 = vadd.f32 %v243, %v244
    %v246 = vadd.f32 %v218, 0.0
    %v247 = vsub.f32 %v246, %v238
    %v248 = vmax.f32 %v247, 0.0
    %v249 = vsub.f32 %v246, %v245
    %v250 = vmax.f32 %v249, 0.0
    %vm251 = vcmp.ne.s32.totalorder %v222, %v224
    %vm252 = vcmp.lt.s32.totalorder %v222, 8
    %vm253 = vmand %vm251, %vm252
    %vm254 = vcmp.lt.s32.totalorder %v224, 8
    %vm255 = vmand %vm253, %vm254
    %v256 = vadd.f32 %v248, %v250
    %v257 = vsel %vm255, %v256, 0.0
    %258 = vadd.xlane.f32.xlu0 %v257
    %v259 = vpop.xlane.xlu0 %258
    %v260 = vrot.slane %v259, 4
    %v261 = vadd.f32 %v259, %v260
    %v262 = vrot.slane %v261, 2
    %v263 = vadd.f32 %v261, %v262
    %v264 = vrot.slane %v263, 1
    %v265 = vadd.f32 %v263, %v264
    %s266 = vtos %v265
    %s267 = scalar_lea.smem [#allocation5], 0
    %268 = sst [smem:[%s267]] %s266
    // Predicated region
    $region22: #{tpu_custom_call.1} parent=1 // pred_check
      _
    $region23: #{tpu_custom_call.1} parent=1 // pred_check_branch
      %270 = sbr.rel (0) target = $region25
    $region24: #{tpu_custom_call.1} parent=1 // pred_region
      %s272 = ssub.s32 16, 16
      %273 = vsyncadd [#allocation4], %s272
      %276 = dma.smem_to_hbm [#allocation5], 16, %s4, [#allocation4]
    $region25: #{tpu_custom_call.1} parent=1 // pred_fallthru
      _
    // Predicated region
    $region26: #{tpu_custom_call.1} parent=1 // pred_check
      _
    $region27: #{tpu_custom_call.1} parent=1 // pred_check_branch
      %278 = sbr.rel (0) target = $region29
    $region28: #{tpu_custom_call.1} parent=1 // pred_region
      %279 = dma.done [#allocation4], 16
    $region29: #{tpu_custom_call.1} parent=1 // pred_fallthru
      _
    %280 = sfence
    %281 = vsyncpa [#allocation3], 1
    %282 = vsyncpa [#allocation4], 1

</llo_original>
